<compile_context>
chip_gen: v7x
topology: tpu7x:2x2x1
jax: 0.10.0
libtpu: 0.0.40
codegen_flags: <defaults>
</compile_context>

<pallas_src>
import jax
import jax.numpy as jnp
import numpy as np
from jax.experimental import pallas as pl
from jax.experimental.pallas import tpu as pltpu

LANE = 128
SUBLANE = 8


def _round_up(v, m):
    return (v + m - 1) // m * m


# ----------------------------------------------------------------------------
# Kernel
# ----------------------------------------------------------------------------
def make_ffnn_kernel(num_layers, offsets):
    """Fused kernel. offsets[l] = (lane_offset, padded_width) of layer l's
    slice inside the concatenated shortcut output."""

    def kernel(*refs):
        # refs: x, scW_cat, scb_cat, (W_l, b_l) * L, final_W, final_b, out
        out_ref = refs[-1]
        x_ref, scw_ref, scb_ref = refs[0], refs[1], refs[2]

        xb = x_ref[...].astype(jnp.bfloat16)

        # One matmul for ALL shortcuts (shared LHS), f32 accumulate.
        sc_all = jnp.dot(xb, scw_ref[...], preferred_element_type=jnp.float32)
        sc_all = sc_all + scb_ref[...]

        a = xb  # bf16 activation fed to the next matmul
        idx = 3
        for l in range(num_layers):
            w_ref, b_ref = refs[idx], refs[idx + 1]
            idx += 2
            h = jnp.dot(a, w_ref[...], preferred_element_type=jnp.float32)
            h = h + b_ref[...]                      # BN already folded in
            h = jnp.where(h >= 0.0, h, 0.2 * h)     # LeakyReLU(0.2), f32 VPU
            off, hp = offsets[l]
            h = h + sc_all[:, off:off + hp]         # residual (Dropout = id)
            a = h.astype(jnp.bfloat16)

        fw_ref, fb_ref = refs[idx], refs[idx + 1]
        out = jnp.dot(a, fw_ref[...], preferred_element_type=jnp.float32)
        out_ref[...] = out + fb_ref[...]            # lane-dense (TB, 128) store

    return kernel


# ----------------------------------------------------------------------------
# Wrapper: fold BN into weights, pad to lane-dense shapes, call pallas_call
# ----------------------------------------------------------------------------
def fold_and_pack(raw, eps=1e-5):
    """Fold eval-mode BatchNorms into the Linear layers and pad everything to
    128-lane-dense shapes. Matmul weights are stored in bfloat16."""
    s_in = raw["bn_in"]["gamma"] / jnp.sqrt(raw["bn_in"]["var"] + eps)
    t_in = raw["bn_in"]["beta"] - raw["bn_in"]["mean"] * s_in
    input_dim = s_in.shape[0]

    layers = []
    sc_w_parts, sc_b_parts, offsets = [], [], []
    off = 0
    prev_pad = None
    for li, lyr in enumerate(raw["layers"]):
        W, b = lyr["W"], lyr["b"]
        s = lyr["bn"]["gamma"] / jnp.sqrt(lyr["bn"]["var"] + eps)
        t = lyr["bn"]["beta"] - lyr["bn"]["mean"] * s
        if li == 0:
            # absorb input BN along rows + layer BN along columns
            Wf = (s_in[:, None] * W) * s[None, :]
            bf = (b + t_in @ W) * s + t
            rows = W.shape[0]
        else:
            Wf = W * s[None, :]
            bf = b * s + t
            rows = prev_pad  # rows padded to previous layer's padded width
        h = W.shape[1]
        hp = _round_up(h, LANE)
        Wp = jnp.zeros((rows, hp), jnp.float32).at[:W.shape[0], :h].set(Wf)
        bp = jnp.zeros((1, hp), jnp.float32).at[0, :h].set(bf)

        # shortcut: absorbs the input BN (its LHS is the batch-normed input)
        scW, scb = lyr["sc_W"], lyr["sc_b"]
        scWf = s_in[:, None] * scW
        scbf = scb + t_in @ scW
        scWp = jnp.zeros((input_dim, hp), jnp.float32).at[:, :h].set(scWf)
        scbp = jnp.zeros((1, hp), jnp.float32).at[0, :h].set(scbf)

        layers.append((Wp.astype(jnp.bfloat16), bp))
        sc_w_parts.append(scWp)
        sc_b_parts.append(scbp)
        offsets.append((off, hp))
        off += hp
        prev_pad = hp

    scW_cat = jnp.concatenate(sc_w_parts, axis=1).astype(jnp.bfloat16)
    scb_cat = jnp.concatenate(sc_b_parts, axis=1)

    fW, fb = raw["final_W"], raw["final_b"]
    fWp = (jnp.zeros((prev_pad, LANE), jnp.float32)
           .at[:fW.shape[0], :1].set(fW)).astype(jnp.bfloat16)
    fbp = jnp.zeros((1, LANE), jnp.float32).at[0, :1].set(fb)

    return dict(scW=scW_cat, scb=scb_cat, layers=layers,
                fW=fWp, fb=fbp, offsets=tuple(offsets))


def ffnn_forward(x, packed, *, batch_tile=256):
    B, D = x.shape
    TB = min(batch_tile, _round_up(B, SUBLANE))
    Bp = _round_up(B, TB)
    if Bp != B:
        x = jnp.zeros((Bp, D), x.dtype).at[:B].set(x)
    nb = Bp // TB

    args = [x, packed["scW"], packed["scb"]]
    for Wp, bp in packed["layers"]:
        args += [Wp, bp]
    args += [packed["fW"], packed["fb"]]

    in_specs = [pl.BlockSpec((TB, D), lambda i: (i, 0))]
    for a in args[1:]:
        # weights/biases: same block every grid step -> stay VMEM-resident
        in_specs.append(pl.BlockSpec(a.shape, lambda i: (0, 0)))
    out_spec = pl.BlockSpec((TB, LANE), lambda i: (i, 0))

    kernel = make_ffnn_kernel(len(packed["layers"]), packed["offsets"])
    out = pl.pallas_call(
        kernel,
        out_shape=jax.ShapeDtypeStruct((Bp, LANE), jnp.float32),
        grid=(nb,),
        in_specs=in_specs,
        out_specs=out_spec,
        compiler_params=pltpu.CompilerParams(
            dimension_semantics=("parallel",),
            vmem_limit_bytes=32 * 1024 * 1024,
        ),
    )(*args)
    return out[:B, :1]


# ----------------------------------------------------------------------------
# Raw (PyTorch-like) parameters + references
# ----------------------------------------------------------------------------
def init_raw_params(key, input_dim, hidden_layers):
    n = len(hidden_layers)
    keys = jax.random.split(key, 3 * n + 2)
    it = iter(keys)

    def linear(k, fan_in, fan_out):
        k1, k2 = jax.random.split(k)
        bound = 1.0 / np.sqrt(fan_in)
        W = jax.random.uniform(k1, (fan_in, fan_out), jnp.float32, -bound, bound)
        b = jax.random.uniform(k2, (fan_out,), jnp.float32, -bound, bound)
        return W, b

    def bn(k, dim):
        k1, k2, k3, k4 = jax.random.split(k, 4)
        return dict(
            gamma=1.0 + 0.1 * jax.random.normal(k1, (dim,), jnp.float32),
            beta=0.1 * jax.random.normal(k2, (dim,), jnp.float32),
            mean=0.1 * jax.random.normal(k3, (dim,), jnp.float32),
            var=jax.random.uniform(k4, (dim,), jnp.float32, 0.5, 1.5),
        )

    bn_in = bn(next(it), input_dim)
    layers = []
    prev = input_dim
    for h in hidden_layers:
        W, b = linear(next(it), prev, h)
        bn_l = bn(next(it), h)
        scW, scb = linear(next(it), input_dim, h)
        layers.append(dict(W=W, b=b, bn=bn_l, sc_W=scW, sc_b=scb))
        prev = h
    fW, fb = linear(next(it), prev, 1)
    return dict(bn_in=bn_in, layers=layers, final_W=fW, final_b=fb)


def ffnn_reference_f32(x, raw, eps=1e-5):
    """Unfolded f32 eval-mode reference (matches the PyTorch module)."""
    def bn_apply(v, p):
        s = p["gamma"] / jnp.sqrt(p["var"] + eps)
        return (v - p["mean"]) * s + p["beta"]

    x = bn_apply(x, raw["bn_in"])
    orig = x
    for lyr in raw["layers"]:
        h = x @ lyr["W"] + lyr["b"]
        h = bn_apply(h, lyr["bn"])
        h = jnp.where(h >= 0, h, 0.2 * h)
        x = h + (orig @ lyr["sc_W"] + lyr["sc_b"])
    return x @ raw["final_W"] + raw["final_b"]


def ffnn_reference_folded(x, packed):
    """Same folded/bf16 math as the kernel, in pure JAX (tight check)."""
    xb = x.astype(jnp.bfloat16)
    sc_all = jnp.dot(xb, packed["scW"], preferred_element_type=jnp.float32)
    sc_all = sc_all + packed["scb"]
    a = xb
    for (Wp, bp), (off, hp) in zip(packed["layers"], packed["offsets"]):
        h = jnp.dot(a, Wp, preferred_element_type=jnp.float32) + bp
        h = jnp.where(h >= 0, h, 0.2 * h)
        h = h + sc_all[:, off:off + hp]
        a = h.astype(jnp.bfloat16)
    out = jnp.dot(a, packed["fW"], preferred_element_type=jnp.float32)
    return (out + packed["fb"])[:, :1]


if __name__ == "__main__":
    batch = 8
    input_dim = 16
    hidden_layers = (32, 32)

    key = jax.random.PRNGKey(0)
    kx, kp = jax.random.split(key)
    x = jax.random.normal(kx, (batch, input_dim), jnp.float32)

    raw = init_raw_params(kp, input_dim, hidden_layers)
    packed = fold_and_pack(raw)

    out = jax.block_until_ready(ffnn_forward(x, packed))
    assert out.shape == (batch, 1)

    # Tight check vs. identical folded/bf16 math.
    ref_folded = ffnn_reference_folded(x, packed)
    np.testing.assert_allclose(np.asarray(out), np.asarray(ref_folded),
                               rtol=2e-3, atol=2e-3)

    # Loose check vs. the unfolded f32 module semantics (bf16 rounding).
    ref_f32 = ffnn_reference_f32(x, raw)
    np.testing.assert_allclose(np.asarray(out), np.asarray(ref_f32),
                               rtol=5e-2, atol=5e-2)

    print("KERNEL_OK")
</pallas_src>

<mosaic_0001>
module attributes {stable_mosaic.version = 11 : i64} {
  func.func @kernel(%arg0: i32, %arg1: memref<8x16xf32, #tpu.memory_space<vmem>>, %arg2: memref<16x256xbf16, #tpu.memory_space<vmem>>, %arg3: memref<1x256xf32, #tpu.memory_space<vmem>>, %arg4: memref<16x128xbf16, #tpu.memory_space<vmem>>, %arg5: memref<1x128xf32, #tpu.memory_space<vmem>>, %arg6: memref<128x128xbf16, #tpu.memory_space<vmem>>, %arg7: memref<1x128xf32, #tpu.memory_space<vmem>>, %arg8: memref<128x128xbf16, #tpu.memory_space<vmem>>, %arg9: memref<1x128xf32, #tpu.memory_space<vmem>>, %arg10: memref<8x128xf32, #tpu.memory_space<vmem>>) attributes {dimension_semantics = [#tpu.dimension_semantics<parallel>], iteration_bounds = array<i64: 1>, scalar_prefetch = 0 : i64, scratch_operands = 0 : i64, tpu.core_type = #tpu.core_type<tc>, window_params = [{transform_indices = @transform_0, window_bounds = array<i64: 8, 16>}, {pipeline_mode = #tpu.pipeline_mode<synchronous>, transform_indices = @transform_1, window_bounds = array<i64: 16, 256>}, {pipeline_mode = #tpu.pipeline_mode<synchronous>, transform_indices = @transform_2, window_bounds = array<i64: 1, 256>}, {pipeline_mode = #tpu.pipeline_mode<synchronous>, transform_indices = @transform_3, window_bounds = array<i64: 16, 128>}, {pipeline_mode = #tpu.pipeline_mode<synchronous>, transform_indices = @transform_4, window_bounds = array<i64: 1, 128>}, {pipeline_mode = #tpu.pipeline_mode<synchronous>, transform_indices = @transform_5, window_bounds = array<i64: 128, 128>}, {pipeline_mode = #tpu.pipeline_mode<synchronous>, transform_indices = @transform_6, window_bounds = array<i64: 1, 128>}, {pipeline_mode = #tpu.pipeline_mode<synchronous>, transform_indices = @transform_7, window_bounds = array<i64: 128, 128>}, {pipeline_mode = #tpu.pipeline_mode<synchronous>, transform_indices = @transform_8, window_bounds = array<i64: 1, 128>}, {transform_indices = @transform_9, window_bounds = array<i64: 8, 128>}]} {
    %c0 = arith.constant 0 : index
    %c0_0 = arith.constant 0 : index
    %0 = vector.load %arg1[%c0, %c0_0] : memref<8x16xf32, #tpu.memory_space<vmem>>, vector<8x16xf32>
    %1 = arith.truncf %0 : vector<8x16xf32> to vector<8x16xbf16>
    %c0_1 = arith.constant 0 : index
    %c0_2 = arith.constant 0 : index
    %2 = vector.load %arg2[%c0_1, %c0_2] : memref<16x256xbf16, #tpu.memory_space<vmem>>, vector<16x256xbf16>
    %cst = arith.constant dense<0.000000e+00> : vector<8x256xf32>
    %3 = tpu.matmul %1, %2, %cst {dimension_numbers = #tpu.dot_dimension_numbers<[1], [0], [0], [1], [0, 0, 1, 1], [], []>} : vector<8x16xbf16>, vector<16x256xbf16>, vector<8x256xf32> -> vector<8x256xf32>
    %c0_3 = arith.constant 0 : index
    %c0_4 = arith.constant 0 : index
    %4 = vector.load %arg3[%c0_3, %c0_4] : memref<1x256xf32, #tpu.memory_space<vmem>>, vector<1x256xf32>
    %5 = vector.broadcast %4 : vector<1x256xf32> to vector<8x256xf32>
    %6 = arith.addf %3, %5 : vector<8x256xf32>
    %c0_5 = arith.constant 0 : index
    %c0_6 = arith.constant 0 : index
    %7 = vector.load %arg4[%c0_5, %c0_6] : memref<16x128xbf16, #tpu.memory_space<vmem>>, vector<16x128xbf16>
    %cst_7 = arith.constant dense<0.000000e+00> : vector<8x128xf32>
    %8 = tpu.matmul %1, %7, %cst_7 {dimension_numbers = #tpu.dot_dimension_numbers<[1], [0], [0], [1], [0, 0, 1, 1], [], []>} : vector<8x16xbf16>, vector<16x128xbf16>, vector<8x128xf32> -> vector<8x128xf32>
    %c0_8 = arith.constant 0 : index
    %c0_9 = arith.constant 0 : index
    %9 = vector.load %arg5[%c0_8, %c0_9] : memref<1x128xf32, #tpu.memory_space<vmem>>, vector<1x128xf32>
    %10 = vector.broadcast %9 : vector<1x128xf32> to vector<8x128xf32>
    %11 = arith.addf %8, %10 : vector<8x128xf32>
    %cst_10 = arith.constant 0.000000e+00 : f32
    %12 = vector.broadcast %cst_10 : f32 to vector<8x128xf32>
    %13 = arith.cmpf oge, %11, %12 : vector<8x128xf32>
    %cst_11 = arith.constant 2.000000e-01 : f32
    %14 = vector.broadcast %cst_11 : f32 to vector<8x128xf32>
    %15 = arith.mulf %14, %11 : vector<8x128xf32>
    %16 = arith.select %13, %11, %15 : vector<8x128xi1>, vector<8x128xf32>
    %17 = vector.extract_strided_slice %6 {offsets = [0, 0], sizes = [8, 128], strides = [1, 1]} : vector<8x256xf32> to vector<8x128xf32>
    %18 = arith.addf %16, %17 : vector<8x128xf32>
    %19 = arith.truncf %18 : vector<8x128xf32> to vector<8x128xbf16>
    %c0_12 = arith.constant 0 : index
    %c0_13 = arith.constant 0 : index
    %20 = vector.load %arg6[%c0_12, %c0_13] : memref<128x128xbf16, #tpu.memory_space<vmem>>, vector<128x128xbf16>
    %cst_14 = arith.constant dense<0.000000e+00> : vector<8x128xf32>
    %21 = tpu.matmul %19, %20, %cst_14 {dimension_numbers = #tpu.dot_dimension_numbers<[1], [0], [0], [1], [0, 0, 1, 1], [], []>} : vector<8x128xbf16>, vector<128x128xbf16>, vector<8x128xf32> -> vector<8x128xf32>
    %c0_15 = arith.constant 0 : index
    %c0_16 = arith.constant 0 : index
    %22 = vector.load %arg7[%c0_15, %c0_16] : memref<1x128xf32, #tpu.memory_space<vmem>>, vector<1x128xf32>
    %23 = vector.broadcast %22 : vector<1x128xf32> to vector<8x128xf32>
    %24 = arith.addf %21, %23 : vector<8x128xf32>
    %cst_17 = arith.constant 0.000000e+00 : f32
    %25 = vector.broadcast %cst_17 : f32 to vector<8x128xf32>
    %26 = arith.cmpf oge, %24, %25 : vector<8x128xf32>
    %cst_18 = arith.constant 2.000000e-01 : f32
    %27 = vector.broadcast %cst_18 : f32 to vector<8x128xf32>
    %28 = arith.mulf %27, %24 : vector<8x128xf32>
    %29 = arith.select %26, %24, %28 : vector<8x128xi1>, vector<8x128xf32>
    %30 = vector.extract_strided_slice %6 {offsets = [0, 128], sizes = [8, 128], strides = [1, 1]} : vector<8x256xf32> to vector<8x128xf32>
    %31 = arith.addf %29, %30 : vector<8x128xf32>
    %32 = arith.truncf %31 : vector<8x128xf32> to vector<8x128xbf16>
    %c0_19 = arith.constant 0 : index
    %c0_20 = arith.constant 0 : index
    %33 = vector.load %arg8[%c0_19, %c0_20] : memref<128x128xbf16, #tpu.memory_space<vmem>>, vector<128x128xbf16>
    %cst_21 = arith.constant dense<0.000000e+00> : vector<8x128xf32>
    %34 = tpu.matmul %32, %33, %cst_21 {dimension_numbers = #tpu.dot_dimension_numbers<[1], [0], [0], [1], [0, 0, 1, 1], [], []>} : vector<8x128xbf16>, vector<128x128xbf16>, vector<8x128xf32> -> vector<8x128xf32>
    %c0_22 = arith.constant 0 : index
    %c0_23 = arith.constant 0 : index
    %35 = vector.load %arg9[%c0_22, %c0_23] : memref<1x128xf32, #tpu.memory_space<vmem>>, vector<1x128xf32>
    %36 = vector.broadcast %35 : vector<1x128xf32> to vector<8x128xf32>
    %37 = arith.addf %34, %36 : vector<8x128xf32>
    %c0_24 = arith.constant 0 : index
    %c0_25 = arith.constant 0 : index
    %38 = vector.load %arg10[%c0_24, %c0_25] : memref<8x128xf32, #tpu.memory_space<vmem>>, vector<8x128xf32>
    tpu.vector_store %arg10[%c0_24, %c0_25], %37 {strides = array<i32>} : memref<8x128xf32, #tpu.memory_space<vmem>>, vector<8x128xf32>,
    return
  }
  func.func @transform_0(%arg0: i32) -> (i32, i32) {
    %c0_i32 = arith.constant 0 : i32
    %c0_i32_0 = arith.constant 0 : i32
    return %arg0, %c0_i32 : i32, i32
  }
  func.func @transform_1(%arg0: i32) -> (i32, i32) {
    %c0_i32 = arith.constant 0 : i32
    %c0_i32_0 = arith.constant 0 : i32
    %c0_i32_1 = arith.constant 0 : i32
    return %c0_i32, %c0_i32_0 : i32, i32
  }
  func.func @transform_2(%arg0: i32) -> (i32, i32) {
    %c0_i32 = arith.constant 0 : i32
    %c0_i32_0 = arith.constant 0 : i32
    %c0_i32_1 = arith.constant 0 : i32
    return %c0_i32, %c0_i32_0 : i32, i32
  }
  func.func @transform_3(%arg0: i32) -> (i32, i32) {
    %c0_i32 = arith.constant 0 : i32
    %c0_i32_0 = arith.constant 0 : i32
    %c0_i32_1 = arith.constant 0 : i32
    return %c0_i32, %c0_i32_0 : i32, i32
  }
  func.func @transform_4(%arg0: i32) -> (i32, i32) {
    %c0_i32 = arith.constant 0 : i32
    %c0_i32_0 = arith.constant 0 : i32
    %c0_i32_1 = arith.constant 0 : i32
    return %c0_i32, %c0_i32_0 : i32, i32
  }
  func.func @transform_5(%arg0: i32) -> (i32, i32) {
    %c0_i32 = arith.constant 0 : i32
    %c0_i32_0 = arith.constant 0 : i32
    %c0_i32_1 = arith.constant 0 : i32
    return %c0_i32, %c0_i32_0 : i32, i32
  }
  func.func @transform_6(%arg0: i32) -> (i32, i32) {
    %c0_i32 = arith.constant 0 : i32
    %c0_i32_0 = arith.constant 0 : i32
    %c0_i32_1 = arith.constant 0 : i32
    return %c0_i32, %c0_i32_0 : i32, i32
  }
  func.func @transform_7(%arg0: i32) -> (i32, i32) {
    %c0_i32 = arith.constant 0 : i32
    %c0_i32_0 = arith.constant 0 : i32
    %c0_i32_1 = arith.constant 0 : i32
    return %c0_i32, %c0_i32_0 : i32, i32
  }
  func.func @transform_8(%arg0: i32) -> (i32, i32) {
    %c0_i32 = arith.constant 0 : i32
    %c0_i32_0 = arith.constant 0 : i32
    %c0_i32_1 = arith.constant 0 : i32
    return %c0_i32, %c0_i32_0 : i32, i32
  }
  func.func @transform_9(%arg0: i32) -> (i32, i32) {
    %c0_i32 = arith.constant 0 : i32
    %c0_i32_0 = arith.constant 0 : i32
    return %arg0, %c0_i32 : i32, i32
  }
}

</mosaic_0001>

<llo_original>
// kernel: tpu_custom_call.1
$region0: #{tpu_custom_call.1}
  #allocation0 [shape = 'u32[]', space=smem, size = 0x4, offset = 0x4, fixed_abs, tag = 'smem constant byte address 0x4 - core index']
  #allocation1 [shape = 'u32[144,128]{1,0:T(1,128)}', space=vmem, size = 0x12000, scoped, tag = 'internal scratch']
  %s0 = inlined_call_operand.hbm [shape: f32[8,16], index: 0, kind: input, shape index: {}]
  %s1 = inlined_call_operand.hbm [shape: bf16[16,256], index: 1, kind: input, shape index: {}]
  %s2 = inlined_call_operand.vmem [shape: f32[1,256], index: 2, kind: input, shape index: {}]
  %s3 = inlined_call_operand.vmem [shape: bf16[16,128], index: 3, kind: input, shape index: {}]
  %s4 = inlined_call_operand.vmem [shape: f32[1,128], index: 4, kind: input, shape index: {}]
  %s5 = inlined_call_operand.hbm [shape: bf16[128,128], index: 5, kind: input, shape index: {}]
  %s6 = inlined_call_operand.vmem [shape: f32[1,128], index: 6, kind: input, shape index: {}]
  %s7 = inlined_call_operand.hbm [shape: bf16[128,128], index: 7, kind: input, shape index: {}]
  %s8 = inlined_call_operand.vmem [shape: f32[1,128], index: 8, kind: input, shape index: {}]
  %s9 = inlined_call_operand.hbm [shape: f32[8,128], index: 9, kind: output, shape index: {}]
  %s10 = sld [smem:[#allocation0]]
  $region62: #{tpu_custom_call.1} parent=0
    _
  %s12 = ssub.s32 1, %s10
  %s13 = scalar_select 0, %s12, %s10
  $region1: #{tpu_custom_call.1} parent=0
    #allocation2 [shape = 'u8[4096]{0}', space=vmem, size = 0x1000, scoped, tag = 'input window, operand 0, single buffered']
    #allocation3 [shape = 's32[1]{0}', space=sflag, size = 0x4, scoped, tag = 'scoped memory for tpu_custom_call.1']
    #allocation4 [shape = 's32[1]{0}', space=sflag, size = 0x4, scoped, tag = 'scoped memory for tpu_custom_call.1']
    #allocation5 [shape = 'u8[8192]{0}', space=vmem, size = 0x2000, scoped, tag = 'input window, operand 1, single buffered']
    #allocation6 [shape = 's32[1]{0}', space=sflag, size = 0x4, scoped, tag = 'scoped memory for tpu_custom_call.1']
    #allocation7 [shape = 'u8[32768]{0}', space=vmem, size = 0x8000, scoped, tag = 'input window, operand 5, single buffered']
    #allocation8 [shape = 'u8[32768]{0}', space=vmem, size = 0x8000, scoped, tag = 'input window, operand 7, single buffered']
    #allocation9 [shape = 's32[1]{0}', space=sflag, size = 0x4, scoped, tag = 'scoped memory for tpu_custom_call.1']
    #allocation10 [shape = 'u8[4096]{0}', space=vmem, size = 0x1000, scoped, tag = 'output window, operand 0, single buffered']
    %14 = vsyncpa [#allocation3], 0
    %15 = vsyncpa [#allocation6], 0
    %16 = vsyncpa [#allocation9], 0
    %17 = vsyncpa [#allocation4], 0
    // Predicated region
    $region2: #{tpu_custom_call.1} parent=1 // pred_check
      _
    $region3: #{tpu_custom_call.1} parent=1 // pred_check_branch
      %19 = sbr.rel (0) target = $region5
    $region4: #{tpu_custom_call.1} parent=1 // pred_region
      %s21 = ssub.s32 128, 128
      %22 = vsyncadd [#allocation3], %s21
      %s24 = sshll.u32 [#allocation2], 4
      %s25 = int_to_ptr.vmem [resolvable:$true] %s24
      %27 = dma.hbm_to_vmem [thread:$0]  %s0, 128, %s25, [#allocation3]
    $region5: #{tpu_custom_call.1} parent=1 // pred_fallthru
      _
    // Predicated region
    $region6: #{tpu_custom_call.1} parent=1 // pred_check
      _
    $region7: #{tpu_custom_call.1} parent=1 // pred_check_branch
      %29 = sbr.rel (0) target = $region9
    $region8: #{tpu_custom_call.1} parent=1 // pred_region
      %s31 = ssub.s32 256, 256
      %32 = vsyncadd [#allocation6], %s31
      %s33 = sshll.u32 [#allocation5], 4
      %s34 = int_to_ptr.vmem [resolvable:$true] %s33
      %39 = dma.hbm_to_vmem [thread:$0]  %s1, 256, %s34, [#allocation6], 128, 128, 8
    $region9: #{tpu_custom_call.1} parent=1 // pred_fallthru
      _
    // Predicated region
    $region10: #{tpu_custom_call.1} parent=1 // pred_check
      _
    $region11: #{tpu_custom_call.1} parent=1 // pred_check_branch
      %41 = sbr.rel (0) target = $region13
    $region12: #{tpu_custom_call.1} parent=1 // pred_region
      _
    $region13: #{tpu_custom_call.1} parent=1 // pred_fallthru
      _
    // Predicated region
    $region14: #{tpu_custom_call.1} parent=1 // pred_check
      _
    $region15: #{tpu_custom_call.1} parent=1 // pred_check_branch
      %43 = sbr.rel (0) target = $region17
    $region16: #{tpu_custom_call.1} parent=1 // pred_region
      _
    $region17: #{tpu_custom_call.1} parent=1 // pred_fallthru
      _
    // Predicated region
    $region18: #{tpu_custom_call.1} parent=1 // pred_check
      _
    $region19: #{tpu_custom_call.1} parent=1 // pred_check_branch
      %45 = sbr.rel (0) target = $region21
    $region20: #{tpu_custom_call.1} parent=1 // pred_region
      _
    $region21: #{tpu_custom_call.1} parent=1 // pred_fallthru
      _
    // Predicated region
    $region22: #{tpu_custom_call.1} parent=1 // pred_check
      _
    $region23: #{tpu_custom_call.1} parent=1 // pred_check_branch
      %47 = sbr.rel (0) target = $region25
    $region24: #{tpu_custom_call.1} parent=1 // pred_region
      %s49 = ssub.s32 1024, 1024
      %50 = vsyncadd [#allocation6], %s49
      %s51 = sshll.u32 [#allocation7], 4
      %s52 = int_to_ptr.vmem [resolvable:$true] %s51
      %57 = dma.hbm_to_vmem [thread:$0]  %s5, 1024, %s52, [#allocation6], 64, 64, 4
    $region25: #{tpu_custom_call.1} parent=1 // pred_fallthru
      _
    // Predicated region
    $region26: #{tpu_custom_call.1} parent=1 // pred_check
      _
    $region27: #{tpu_custom_call.1} parent=1 // pred_check_branch
      %59 = sbr.rel (0) target = $region29
    $region28: #{tpu_custom_call.1} parent=1 // pred_region
      _
    $region29: #{tpu_custom_call.1} parent=1 // pred_fallthru
      _
    // Predicated region
    $region30: #{tpu_custom_call.1} parent=1 // pred_check
      _
    $region31: #{tpu_custom_call.1} parent=1 // pred_check_branch
      %61 = sbr.rel (0) target = $region33
    $region32: #{tpu_custom_call.1} parent=1 // pred_region
      %s63 = ssub.s32 1024, 1024
      %64 = vsyncadd [#allocation9], %s63
      %s65 = sshll.u32 [#allocation8], 4
      %s66 = int_to_ptr.vmem [resolvable:$true] %s65
      %71 = dma.hbm_to_vmem [thread:$0]  %s7, 1024, %s66, [#allocation9], 64, 64, 4
    $region33: #{tpu_custom_call.1} parent=1 // pred_fallthru
      _
    // Predicated region
    $region34: #{tpu_custom_call.1} parent=1 // pred_check
      _
    $region35: #{tpu_custom_call.1} parent=1 // pred_check_branch
      %73 = sbr.rel (0) target = $region37
    $region36: #{tpu_custom_call.1} parent=1 // pred_region
      _
    $region37: #{tpu_custom_call.1} parent=1 // pred_fallthru
      _
    // Predicated region
    $region38: #{tpu_custom_call.1} parent=1 // pred_check
      _
    $region39: #{tpu_custom_call.1} parent=1 // pred_check_branch
      %75 = sbr.rel (0) target = $region41
    $region40: #{tpu_custom_call.1} parent=1 // pred_region
      %76 = dma.done [#allocation3], 128
    $region41: #{tpu_custom_call.1} parent=1 // pred_fallthru
      _
    // Predicated region
    $region42: #{tpu_custom_call.1} parent=1 // pred_check
      _
    $region43: #{tpu_custom_call.1} parent=1 // pred_check_branch
      %78 = sbr.rel (0) target = $region45
    $region44: #{tpu_custom_call.1} parent=1 // pred_region
      %79 = dma.done [#allocation6], 256
    $region45: #{tpu_custom_call.1} parent=1 // pred_fallthru
      _
    // Predicated region
    $region46: #{tpu_custom_call.1} parent=1 // pred_check
      _
    $region47: #{tpu_custom_call.1} parent=1 // pred_check_branch
      %81 = sbr.rel (0) target = $region49
    $region48: #{tpu_custom_call.1} parent=1 // pred_region
      %82 = dma.done [#allocation6], 1024
    $region49: #{tpu_custom_call.1} parent=1 // pred_fallthru
      _
    // Predicated region
    $region50: #{tpu_custom_call.1} parent=1 // pred_check
      _
    $region51: #{tpu_custom_call.1} parent=1 // pred_check_branch
      %84 = sbr.rel (0) target = $region53
    $region52: #{tpu_custom_call.1} parent=1 // pred_region
      %85 = dma.done [#allocation9], 1024
    $region53: #{tpu_custom_call.1} parent=1 // pred_fallthru
      _
    %v87 = vld [vmem:[#allocation2] sm:$0xff]
    %v88 = vpack.c.bf16 %v87, %v87
    %v89 = vld [vmem:[#allocation5] sm:$0xff]
    %v90 = vld [vmem:[#allocation5 + $0x8] sm:$0xff]
    %v91 = vld [vmem:[%s2] sm:$0x3]
    %v93 = vlaneseq
    %v94 = vshrl.u32 %v93, 7
    %v95 = vsub.s32 0, %v94
    %v96 = vrot.slane %v91, %v95
    %v97 = vlaneseq
    %v98 = vshrl.u32 %v97, 7
    %v99 = vsub.s32 1, %v98
    %v100 = vrot.slane %v91, %v99
    %v105 = vunpack.c.l.b16 %v89
    %v106 = vunpack.c.h.b16 %v89
    %v107 = vunpack.c.l.b16 %v90
    %v108 = vunpack.c.h.b16 %v90
    %v109 = vpack.c.b16 %v107, %v105
    %v110 = vpack.c.b16 %v108, %v106
    %vm113 = vcmask 130048
    %v115 = vsel %vm113, %v88, 0
    %117 = vmatprep.subr.bf16.mxu0 %v110
    %118 = vmatpush1.bf16.msra.mxu0 %v109
    %119 = vmatprep.subr.bf16.mxu0 0
    %120 = vmatpush1.bf16.msra.mxu0 0
    %121 = vmatprep.subr.bf16.mxu0 0
    %122 = vmatpush1.bf16.msra.mxu0 0
    %123 = vmatprep.subr.bf16.mxu0 0
    %124 = vmatpush1.bf16.msra.mxu0 0
    %125 = vmatprep.subr.bf16.mxu0 0
    %126 = vmatpush1.bf16.msra.mxu0 0
    %127 = vmatprep.subr.bf16.mxu0 0
    %128 = vmatpush1.bf16.msra.mxu0 0
    %129 = vmatprep.subr.bf16.mxu0 0
    %130 = vmatpush1.bf16.msra.mxu0 0
    %131 = vmatprep.subr.bf16.mxu0 0
    %132 = vmatpush1.bf16.msra.mxu0 0
    %133 = vmatprep.subr.bf16.mxu0 0
    %134 = vmatpush1.bf16.msra.mxu0 0
    %135 = vmatprep.subr.bf16.mxu0 0
    %136 = vmatpush1.bf16.msra.mxu0 0
    %137 = vmatprep.subr.bf16.mxu0 0
    %138 = vmatpush1.bf16.msra.mxu0 0
    %139 = vmatprep.subr.bf16.mxu0 0
    %140 = vmatpush1.bf16.msra.mxu0 0
    %141 = vmatprep.subr.bf16.mxu0 0
    %142 = vmatpush1.bf16.msra.mxu0 0
    %143 = vmatprep.subr.bf16.mxu0 0
    %144 = vmatpush1.bf16.msra.mxu0 0
    %145 = vmatprep.subr.bf16.mxu0 0
    %146 = vmatpush1.bf16.msra.mxu0 0
    %147 = vmatprep.subr.bf16.mxu0 0
    %148 = vmatpush1.bf16.msra.mxu0 0
    %149 = vmatprep.mubr.bf16.mxu0 0
    %150 = vmatmul.mubr.bf16.gmra.mrb[0].mxu0 %v115
    %v151 = vpop.f32.mrb[0].mxu0
    %v152 = vadd.f32 %v96, %v151
    %v153 = vpop.f32.mrb[0].mxu0
    %v154 = vadd.f32 %v100, %v153
    %v155 = vpop.f32.mrb[0].mxu0
    %v156 = vpop.f32.mrb[0].mxu0
    %157 = vdwg.mxu0
    %v158 = vld [vmem:[%s3] sm:$0xf]
    %v159 = vld [vmem:[%s3 + $0x4] sm:$0xf]
    %v160 = vld [vmem:[%s4] sm:$0x1]
    %v162 = vlaneseq
    %v163 = vshrl.u32 %v162, 7
    %v164 = vsub.s32 0, %v163
    %v165 = vrot.slane %v160, %v164
    %v169 = vunpack.c.l.b16 %v158
    %v170 = vunpack.c.l.b16 %v159
    %v171 = vpack.c.b16 %v170, %v169
    %173 = vmatprep.subr.bf16.mxu0 0
    %174 = vmatpush1.bf16.msra.mxu0 %v171
    %175 = vmatprep.subr.bf16.mxu0 0
    %176 = vmatpush1.bf16.msra.mxu0 0
    %177 = vmatprep.subr.bf16.mxu0 0
    %178 = vmatpush1.bf16.msra.mxu0 0
    %179 = vmatprep.subr.bf16.mxu0 0
    %180 = vmatpush1.bf16.msra.mxu0 0
    %181 = vmatprep.subr.bf16.mxu0 0
    %182 = vmatpush1.bf16.msra.mxu0 0
    %183 = vmatprep.subr.bf16.mxu0 0
    %184 = vmatpush1.bf16.msra.mxu0 0
    %185 = vmatprep.subr.bf16.mxu0 0
    %186 = vmatpush1.bf16.msra.mxu0 0
    %187 = vmatprep.subr.bf16.mxu0 0
    %188 = vmatpush1.bf16.msra.mxu0 0
    %189 = vmatprep.subr.bf16.mxu0 0
    %190 = vmatpush1.bf16.msra.mxu0 0
    %191 = vmatprep.subr.bf16.mxu0 0
    %192 = vmatpush1.bf16.msra.mxu0 0
    %193 = vmatprep.subr.bf16.mxu0 0
    %194 = vmatpush1.bf16.msra.mxu0 0
    %195 = vmatprep.subr.bf16.mxu0 0
    %196 = vmatpush1.bf16.msra.mxu0 0
    %197 = vmatprep.subr.bf16.mxu0 0
    %198 = vmatpush1.bf16.msra.mxu0 0
    %199 = vmatprep.subr.bf16.mxu0 0
    %200 = vmatpush1.bf16.msra.mxu0 0
    %201 = vmatprep.subr.bf16.mxu0 0
    %202 = vmatpush1.bf16.msra.mxu0 0
    %203 = vmatprep.subr.bf16.mxu0 0
    %204 = vmatpush1.bf16.msra.mxu0 0
    %205 = vmatprep.mubr.bf16.mxu0 0
    %206 = vmatmul.mubr.bf16.gmra.mrb[0].mxu0 %v115
    %v207 = vpop.f32.mrb[0].mxu0
    %v208 = vadd.f32 %v165, %v207
    %v209 = vpop.f32.mrb[0].mxu0
    %v210 = vpop.f32.mrb[0].mxu0
    %v211 = vpop.f32.mrb[0].mxu0
    %212 = vdwg.mxu0
    %vm213 = vcmp.ge.f32.partialorder %v208, 0.0
    %v214 = vmul.f32 %v208, 0.2
    %v215 = vsel %vm213, %v208, %v214
    %v216 = vadd.f32 %v215, %v152
    %v217 = vpack.c.bf16 %v216, %v216
    %v218 = vld [vmem:[#allocation7] sm:$0xf]
    %v219 = vld [vmem:[#allocation7 + $0x4] sm:$0xf]
    %v220 = vld [vmem:[#allocation7 + $0x8] sm:$0xf]
    %v221 = vld [vmem:[#allocation7 + $0xc] sm:$0xf]
    %v222 = vld [vmem:[#allocation7 + $0x10] sm:$0xf]
    %v223 = vld [vmem:[#allocation7 + $0x14] sm:$0xf]
    %v224 = vld [vmem:[#allocation7 + $0x18] sm:$0xf]
    %v225 = vld [vmem:[#allocation7 + $0x1c] sm:$0xf]
    %v226 = vld [vmem:[#allocation7 + $0x20] sm:$0xf]
    %v227 = vld [vmem:[#allocation7 + $0x24] sm:$0xf]
    %v228 = vld [vmem:[#allocation7 + $0x28] sm:$0xf]
    %v229 = vld [vmem:[#allocation7 + $0x2c] sm:$0xf]
    %v230 = vld [vmem:[#allocation7 + $0x30] sm:$0xf]
    %v231 = vld [vmem:[#allocation7 + $0x34] sm:$0xf]
    %v232 = vld [vmem:[#allocation7 + $0x38] sm:$0xf]
    %v233 = vld [vmem:[#allocation7 + $0x3c] sm:$0xf]
    %v234 = vld [vmem:[%s6] sm:$0x1]
    %v236 = vlaneseq
    %v237 = vshrl.u32 %v236, 7
    %v238 = vsub.s32 0, %v237
    %v239 = vrot.slane %v234, %v238
    %v257 = vunpack.c.l.b16 %v218
    %v258 = vunpack.c.l.b16 %v219
    %v259 = vunpack.c.l.b16 %v220
    %v260 = vunpack.c.l.b16 %v221
    %v261 = vunpack.c.l.b16 %v222
    %v262 = vunpack.c.l.b16 %v223
    %v263 = vunpack.c.l.b16 %v224
    %v264 = vunpack.c.l.b16 %v225
    %v265 = vunpack.c.l.b16 %v226
    %v266 = vunpack.c.l.b16 %v227
    %v267 = vunpack.c.l.b16 %v228
    %v268 = vunpack.c.l.b16 %v229
    %v269 = vunpack.c.l.b16 %v230
    %v270 = vunpack.c.l.b16 %v231
    %v271 = vunpack.c.l.b16 %v232
    %v272 = vunpack.c.l.b16 %v233
    %v273 = vpack.c.b16 %v258, %v257
    %v274 = vpack.c.b16 %v260, %v259
    %v275 = vpack.c.b16 %v262, %v261
    %v276 = vpack.c.b16 %v264, %v263
    %v277 = vpack.c.b16 %v266, %v265
    %v278 = vpack.c.b16 %v268, %v267
    %v279 = vpack.c.b16 %v270, %v269
    %v280 = vpack.c.b16 %v272, %v271
    %289 = vmatprep.subr.bf16.mxu0 0
    %290 = vmatpush1.bf16.msra.mxu0 %v273
    %291 = vmatprep.subr.bf16.mxu0 0
    %292 = vmatpush1.bf16.msra.mxu0 %v274
    %293 = vmatprep.subr.bf16.mxu0 0
    %294 = vmatpush1.bf16.msra.mxu0 %v275
    %295 = vmatprep.subr.bf16.mxu0 0
    %296 = vmatpush1.bf16.msra.mxu0 %v276
    %297 = vmatprep.subr.bf16.mxu0 0
    %298 = vmatpush1.bf16.msra.mxu0 %v277
    %299 = vmatprep.subr.bf16.mxu0 0
    %300 = vmatpush1.bf16.msra.mxu0 %v278
    %301 = vmatprep.subr.bf16.mxu0 0
    %302 = vmatpush1.bf16.msra.mxu0 %v279
    %303 = vmatprep.subr.bf16.mxu0 0
    %304 = vmatpush1.bf16.msra.mxu0 %v280
    %305 = vmatprep.subr.bf16.mxu0 0
    %306 = vmatpush1.bf16.msra.mxu0 0
    %307 = vmatprep.subr.bf16.mxu0 0
    %308 = vmatpush1.bf16.msra.mxu0 0
    %309 = vmatprep.subr.bf16.mxu0 0
    %310 = vmatpush1.bf16.msra.mxu0 0
    %311 = vmatprep.subr.bf16.mxu0 0
    %312 = vmatpush1.bf16.msra.mxu0 0
    %313 = vmatprep.subr.bf16.mxu0 0
    %314 = vmatpush1.bf16.msra.mxu0 0
    %315 = vmatprep.subr.bf16.mxu0 0
    %316 = vmatpush1.bf16.msra.mxu0 0
    %317 = vmatprep.subr.bf16.mxu0 0
    %318 = vmatpush1.bf16.msra.mxu0 0
    %319 = vmatprep.subr.bf16.mxu0 0
    %320 = vmatpush1.bf16.msra.mxu0 0
    %321 = vmatprep.mubr.bf16.mxu0 0
    %322 = vmatmul.mubr.bf16.gmra.mrb[0].mxu0 %v217
    %v323 = vpop.f32.mrb[0].mxu0
    %v324 = vadd.f32 %v239, %v323
    %v325 = vpop.f32.mrb[0].mxu0
    %v326 = vpop.f32.mrb[0].mxu0
    %v327 = vpop.f32.mrb[0].mxu0
    %328 = vdwg.mxu0
    %vm329 = vcmp.ge.f32.partialorder %v324, 0.0
    %v330 = vmul.f32 %v324, 0.2
    %v331 = vsel %vm329, %v324, %v330
    %v332 = vadd.f32 %v331, %v154
    %v333 = vpack.c.bf16 %v332, %v332
    %v334 = vld [vmem:[#allocation8] sm:$0xf]
    %v335 = vld [vmem:[#allocation8 + $0x4] sm:$0xf]
    %v336 = vld [vmem:[#allocation8 + $0x8] sm:$0xf]
    %v337 = vld [vmem:[#allocation8 + $0xc] sm:$0xf]
    %v338 = vld [vmem:[#allocation8 + $0x10] sm:$0xf]
    %v339 = vld [vmem:[#allocation8 + $0x14] sm:$0xf]
    %v340 = vld [vmem:[#allocation8 + $0x18] sm:$0xf]
    %v341 = vld [vmem:[#allocation8 + $0x1c] sm:$0xf]
    %v342 = vld [vmem:[#allocation8 + $0x20] sm:$0xf]
    %v343 = vld [vmem:[#allocation8 + $0x24] sm:$0xf]
    %v344 = vld [vmem:[#allocation8 + $0x28] sm:$0xf]
    %v345 = vld [vmem:[#allocation8 + $0x2c] sm:$0xf]
    %v346 = vld [vmem:[#allocation8 + $0x30] sm:$0xf]
    %v347 = vld [vmem:[#allocation8 + $0x34] sm:$0xf]
    %v348 = vld [vmem:[#allocation8 + $0x38] sm:$0xf]
    %v349 = vld [vmem:[#allocation8 + $0x3c] sm:$0xf]
    %v350 = vld [vmem:[%s8] sm:$0x1]
    %v352 = vlaneseq
    %v353 = vshrl.u32 %v352, 7
    %v354 = vsub.s32 0, %v353
    %v355 = vrot.slane %v350, %v354
    %v373 = vunpack.c.l.b16 %v334
    %v374 = vunpack.c.l.b16 %v335
    %v375 = vunpack.c.l.b16 %v336
    %v376 = vunpack.c.l.b16 %v337
    %v377 = vunpack.c.l.b16 %v338
    %v378 = vunpack.c.l.b16 %v339
    %v379 = vunpack.c.l.b16 %v340
    %v380 = vunpack.c.l.b16 %v341
    %v381 = vunpack.c.l.b16 %v342
    %v382 = vunpack.c.l.b16 %v343
    %v383 = vunpack.c.l.b16 %v344
    %v384 = vunpack.c.l.b16 %v345
    %v385 = vunpack.c.l.b16 %v346
    %v386 = vunpack.c.l.b16 %v347
    %v387 = vunpack.c.l.b16 %v348
    %v388 = vunpack.c.l.b16 %v349
    %v389 = vpack.c.b16 %v374, %v373
    %v390 = vpack.c.b16 %v376, %v375
    %v391 = vpack.c.b16 %v378, %v377
    %v392 = vpack.c.b16 %v380, %v379
    %v393 = vpack.c.b16 %v382, %v381
    %v394 = vpack.c.b16 %v384, %v383
    %v395 = vpack.c.b16 %v386, %v385
    %v396 = vpack.c.b16 %v388, %v387
    %405 = vmatprep.subr.bf16.mxu0 0
    %406 = vmatpush1.bf16.msra.mxu0 %v389
    %407 = vmatprep.subr.bf16.mxu0 0
    %408 = vmatpush1.bf16.msra.mxu0 %v390
    %409 = vmatprep.subr.bf16.mxu0 0
    %410 = vmatpush1.bf16.msra.mxu0 %v391
    %411 = vmatprep.subr.bf16.mxu0 0
    %412 = vmatpush1.bf16.msra.mxu0 %v392
    %413 = vmatprep.subr.bf16.mxu0 0
    %414 = vmatpush1.bf16.msra.mxu0 %v393
    %415 = vmatprep.subr.bf16.mxu0 0
    %416 = vmatpush1.bf16.msra.mxu0 %v394
    %417 = vmatprep.subr.bf16.mxu0 0
    %418 = vmatpush1.bf16.msra.mxu0 %v395
    %419 = vmatprep.subr.bf16.mxu0 0
    %420 = vmatpush1.bf16.msra.mxu0 %v396
    %421 = vmatprep.subr.bf16.mxu0 0
    %422 = vmatpush1.bf16.msra.mxu0 0
    %423 = vmatprep.subr.bf16.mxu0 0
    %424 = vmatpush1.bf16.msra.mxu0 0
    %425 = vmatprep.subr.bf16.mxu0 0
    %426 = vmatpush1.bf16.msra.mxu0 0
    %427 = vmatprep.subr.bf16.mxu0 0
    %428 = vmatpush1.bf16.msra.mxu0 0
    %429 = vmatprep.subr.bf16.mxu0 0
    %430 = vmatpush1.bf16.msra.mxu0 0
    %431 = vmatprep.subr.bf16.mxu0 0
    %432 = vmatpush1.bf16.msra.mxu0 0
    %433 = vmatprep.subr.bf16.mxu0 0
    %434 = vmatpush1.bf16.msra.mxu0 0
    %435 = vmatprep.subr.bf16.mxu0 0
    %436 = vmatpush1.bf16.msra.mxu0 0
    %437 = vmatprep.mubr.bf16.mxu0 0
    %438 = vmatmul.mubr.bf16.gmra.mrb[0].mxu0 %v333
    %v439 = vpop.f32.mrb[0].mxu0
    %v440 = vadd.f32 %v355, %v439
    %v441 = vpop.f32.mrb[0].mxu0
    %v442 = vpop.f32.mrb[0].mxu0
    %v443 = vpop.f32.mrb[0].mxu0
    %444 = vdwg.mxu0
    %445 = vst [vmem:[#allocation10] sm:$0xff] %v440
    // Predicated region
    $region54: #{tpu_custom_call.1} parent=1 // pred_check
      _
    $region55: #{tpu_custom_call.1} parent=1 // pred_check_branch
      %447 = sbr.rel (0) target = $region57
    $region56: #{tpu_custom_call.1} parent=1 // pred_region
      %s449 = ssub.s32 128, 128
      %450 = vsyncadd [#allocation4], %s449
      %s452 = sshll.u32 [#allocation10], 4
      %s453 = int_to_ptr.vmem [resolvable:$true] %s452
      %455 = dma.vmem_to_hbm [thread:$0]  %s453, 128, %s9, [#allocation4]
    $region57: #{tpu_custom_call.1} parent=1 // pred_fallthru
      _
    // Predicated region
    $region58: #{tpu_custom_call.1} parent=1 // pred_check
      _
    $region59: #{tpu_custom_call.1} parent=1 // pred_check_branch
      %457 = sbr.rel (0) target = $region61
    $region60: #{tpu_custom_call.1} parent=1 // pred_region
      %458 = dma.done [#allocation4], 128
    $region61: #{tpu_custom_call.1} parent=1 // pred_fallthru
      _
    %459 = vsyncpa [#allocation3], 1
    %460 = vsyncpa [#allocation6], 1
    %461 = vsyncpa [#allocation9], 1
    %462 = vsyncpa [#allocation4], 1

</llo_original>
